<compile_context>
chip_gen: v6e
topology: v6e:2x2x1
jax: 0.10.0
libtpu: 0.0.40
codegen_flags: <defaults>
</compile_context>

<pallas_src>
import functools

import jax
import jax.numpy as jnp
from jax.experimental import pallas as pl
from jax.experimental.pallas import tpu as pltpu


def _round_up(n, m):
    return ((n + m - 1) // m) * m


# --------------------------------------------------------------------------
# Kernel body
# --------------------------------------------------------------------------
def _mlp_kernel(x_ref, w1_ref, b1_ref, w2_ref, b2_ref, w3_ref, b3_ref, o_ref):
    # Layer 1: Linear + ReLU (bf16 operands, f32 accumulation on the MXU).
    h1 = jnp.dot(x_ref[...], w1_ref[...], preferred_element_type=jnp.float32)
    h1 = jnp.maximum(h1 + b1_ref[...], 0.0).astype(w2_ref.dtype)
    # Layer 2: Linear + ReLU.
    h2 = jnp.dot(h1, w2_ref[...], preferred_element_type=jnp.float32)
    h2 = jnp.maximum(h2 + b2_ref[...], 0.0).astype(w3_ref.dtype)
    # Layer 3: Linear.  W3 / b3 are lane-padded to 128 inside VMEM (lane-dense
    # MXU + contiguous weight DMA); only the first out_dim columns are stored
    # into the unpadded output block.
    out = jnp.dot(h2, w3_ref[...], preferred_element_type=jnp.float32) + b3_ref[...]
    o_ref[...] = out[:, : o_ref.shape[-1]].astype(o_ref.dtype)


# --------------------------------------------------------------------------
# Tile / chip heuristics (computed once, outside the jit)
# --------------------------------------------------------------------------
@functools.lru_cache(maxsize=1)
def _chip_defaults():
    """(default batch tile, tensorcores per chip) from the device kind."""
    try:
        kind = jax.devices()[0].device_kind.lower()
    except Exception:
        kind = ""
    if ("v5e" in kind) or ("v5 lite" in kind) or ("v5lite" in kind):
        return 1024, 1          # v5e: smaller scoped VMEM, slower MXU
    if "v7" in kind:
        return 2048, 2          # v7x: 2 TensorCores per chip
    return 2048, 1              # v6e / unknown


def _pick_tm(batch, tm_req, num_tc):
    """16-aligned (bf16 sublane-packed) batch tile.

    - tiny/mid batch: one tile covering the padded batch (no artificial halving
      on single-TC chips).
    - single-tile batch >= 512 on a 2-TC chip: split into 2 so both cores work.
    - large batch: balance tiles so padding stays bounded.
    """
    b16 = _round_up(max(batch, 1), 16)
    if b16 <= tm_req:
        if num_tc >= 2 and b16 >= 512:
            return max(256, _round_up(-(-b16 // 2), 16))
        return b16
    n_tiles = -(-b16 // tm_req)
    return _round_up(-(-b16 // n_tiles), 16)


# --------------------------------------------------------------------------
# Parameter preparation (one-time, outside the hot path)
# --------------------------------------------------------------------------
def prepare_params(params):
    """Cast weights to bf16, biases to f32 row vectors, lane-pad W3/b3 to 128."""
    w1, b1, w2, b2, w3, b3 = params
    hidden = w1.shape[1]
    out_dim = w3.shape[1]
    out_pad = _round_up(out_dim, 128)
    bf = jnp.bfloat16
    w1_bf = jnp.asarray(w1, bf)
    w2_bf = jnp.asarray(w2, bf)
    w3_bf = jnp.pad(jnp.asarray(w3, jnp.float32),
                    ((0, 0), (0, out_pad - out_dim))).astype(bf)
    b1r = jnp.asarray(b1, jnp.float32).reshape(1, hidden)
    b2r = jnp.asarray(b2, jnp.float32).reshape(1, hidden)
    b3r = jnp.pad(jnp.asarray(b3, jnp.float32),
                  (0, out_pad - out_dim)).reshape(1, out_pad)
    prepared = (w1_bf, b1r, w2_bf, b2r, w3_bf, b3r)
    return prepared, out_dim


_PREP_CACHE = {}


def _get_prepared(params):
    key = tuple(id(p) for p in params)
    entry = _PREP_CACHE.get(key)
    if entry is None:
        entry = prepare_params(params)
        _PREP_CACHE[key] = entry
    return entry


# --------------------------------------------------------------------------
# Fused forward
# --------------------------------------------------------------------------
@functools.partial(jax.jit, static_argnames=("out_dim", "tm", "vmem_limit"))
def _forward(x, w1_bf, b1r, w2_bf, b2r, w3_bf, b3r, *, out_dim, tm, vmem_limit):
    B, input_dim = x.shape
    hidden = w1_bf.shape[1]
    out_pad = w3_bf.shape[1]

    B_pad = _round_up(B, tm)
    # Cast first, then pad only the remainder rows (half the pad-copy bytes).
    x_bf = x.astype(jnp.bfloat16)
    if B_pad != B:
        x_bf = jnp.pad(x_bf, ((0, B_pad - B), (0, 0)))

    grid = (B_pad // tm,)

    def _wspec(shape):
        # Resident operand (constant block index): DMA'd once, reused across
        # the whole grid by the pipeline.
        return pl.BlockSpec(shape, lambda i: (0, 0))

    flops = 2 * B_pad * (input_dim * hidden + hidden * hidden + hidden * out_pad)
    bytes_accessed = (
        x_bf.size * 2
        + (w1_bf.size + w2_bf.size + w3_bf.size) * 2
        + (b1r.size + b2r.size + b3r.size) * 4
        + B_pad * out_dim * 4)

    out = pl.pallas_call(
        _mlp_kernel,
        out_shape=jax.ShapeDtypeStruct((B_pad, out_dim), jnp.float32),
        grid_spec=pltpu.PrefetchScalarGridSpec(
            num_scalar_prefetch=0,
            grid=grid,
            in_specs=[
                pl.BlockSpec((tm, input_dim), lambda i: (i, 0)),   # x tile
                _wspec((input_dim, hidden)),                        # W1
                _wspec((1, hidden)),                                # b1
                _wspec((hidden, hidden)),                           # W2
                _wspec((1, hidden)),                                # b2
                _wspec((hidden, out_pad)),                          # W3 (lane-padded)
                _wspec((1, out_pad)),                               # b3 (lane-padded)
            ],
            # Unpadded output: last block dim == full array dim (legal), so the
            # kernel only writes out_dim*4 bytes per row and no wrapper
            # lane-slice is needed.
            out_specs=pl.BlockSpec((tm, out_dim), lambda i: (i, 0)),
        ),
        compiler_params=pltpu.CompilerParams(
            dimension_semantics=("parallel",),
            vmem_limit_bytes=vmem_limit),
        cost_estimate=pl.CostEstimate(
            flops=int(flops),
            transcendentals=0,
            bytes_accessed=int(bytes_accessed)),
    )(x_bf, w1_bf, b1r, w2_bf, b2r, w3_bf, b3r)

    if B_pad != B:
        out = out[:B]
    return out


def pretrain_net_forward(x, params, *, tm=None):
    """Forward pass of PretrainNet. x: (B, input_dim) f32 -> (B, out_dim) f32.

    No host sync here (caller decides when to block); weight casts are cached.
    """
    prepared, out_dim = _get_prepared(params)
    tm_req, num_tc = _chip_defaults()
    if tm is not None:
        tm_req = tm
    tm_eff = _pick_tm(x.shape[0], tm_req, num_tc)
    # Raise the scoped-VMEM limit for big tiles (v5e default is only 16 MiB);
    # 48 MiB is below physical VMEM on every current TPU generation.
    vmem_limit = (48 << 20) if tm_eff >= 1024 else None
    return _forward(x, *prepared, out_dim=out_dim, tm=tm_eff, vmem_limit=vmem_limit)


# --------------------------------------------------------------------------
# Init + reference
# --------------------------------------------------------------------------
def init_params(key, input_dim, hidden=512, output_dim=3):
    """PyTorch-style uniform(-1/sqrt(fan_in), 1/sqrt(fan_in)) init."""
    ks = jax.random.split(key, 6)

    def lin(kw, kb, fan_in, fan_out):
        bound = 1.0 / jnp.sqrt(jnp.float32(fan_in))
        w = jax.random.uniform(kw, (fan_in, fan_out), jnp.float32, -bound, bound)
        b = jax.random.uniform(kb, (fan_out,), jnp.float32, -bound, bound)
        return w, b

    w1, b1 = lin(ks[0], ks[1], input_dim, hidden)
    w2, b2 = lin(ks[2], ks[3], hidden, hidden)
    w3, b3 = lin(ks[4], ks[5], hidden, output_dim)
    return (w1, b1, w2, b2, w3, b3)


def _reference_forward(x, params):
    """Reference matching the kernel numerics (bf16 operands, f32 accumulate)."""
    w1, b1, w2, b2, w3, b3 = params
    bf = jnp.bfloat16
    h = jnp.dot(x.astype(bf), w1.astype(bf), preferred_element_type=jnp.float32) + b1
    h = jnp.maximum(h, 0.0).astype(bf)
    h = jnp.dot(h, w2.astype(bf), preferred_element_type=jnp.float32) + b2
    h = jnp.maximum(h, 0.0).astype(bf)
    return jnp.dot(h, w3.astype(bf), preferred_element_type=jnp.float32) + b3


if __name__ == "__main__":
    key = jax.random.PRNGKey(0)
    k_x, k_p = jax.random.split(key)

    batch, input_dim, output_dim = 8, 32, 3
    x = jax.random.normal(k_x, (batch, input_dim), jnp.float32)
    params = init_params(k_p, input_dim, hidden=512, output_dim=output_dim)

    out = pretrain_net_forward(x, params)
    out = jax.block_until_ready(out)

    ref = _reference_forward(x, params)
    assert out.shape == (batch, output_dim), out.shape
    assert bool(jnp.all(jnp.isfinite(out))), "non-finite output"
    assert jnp.allclose(out, ref, atol=2e-2, rtol=2e-2), "mismatch vs reference"

    print("KERNEL_OK")
</pallas_src>

<mosaic_0001>
module attributes {stable_mosaic.version = 11 : i64} {
  func.func @_mlp_kernel(%arg0: i32, %arg1: memref<16x32xbf16, #tpu.memory_space<vmem>>, %arg2: memref<32x512xbf16, #tpu.memory_space<vmem>>, %arg3: memref<1x512xf32, #tpu.memory_space<vmem>>, %arg4: memref<512x512xbf16, #tpu.memory_space<vmem>>, %arg5: memref<1x512xf32, #tpu.memory_space<vmem>>, %arg6: memref<512x128xbf16, #tpu.memory_space<vmem>>, %arg7: memref<1x128xf32, #tpu.memory_space<vmem>>, %arg8: memref<16x3xf32, #tpu.memory_space<vmem>>) attributes {dimension_semantics = [#tpu.dimension_semantics<parallel>], iteration_bounds = array<i64: 1>, scalar_prefetch = 0 : i64, scratch_operands = 0 : i64, tpu.core_type = #tpu.core_type<tc>, window_params = [{transform_indices = @transform_0, window_bounds = array<i64: 16, 32>}, {pipeline_mode = #tpu.pipeline_mode<synchronous>, transform_indices = @transform_1, window_bounds = array<i64: 32, 512>}, {pipeline_mode = #tpu.pipeline_mode<synchronous>, transform_indices = @transform_2, window_bounds = array<i64: 1, 512>}, {pipeline_mode = #tpu.pipeline_mode<synchronous>, transform_indices = @transform_3, window_bounds = array<i64: 512, 512>}, {pipeline_mode = #tpu.pipeline_mode<synchronous>, transform_indices = @transform_4, window_bounds = array<i64: 1, 512>}, {pipeline_mode = #tpu.pipeline_mode<synchronous>, transform_indices = @transform_5, window_bounds = array<i64: 512, 128>}, {pipeline_mode = #tpu.pipeline_mode<synchronous>, transform_indices = @transform_6, window_bounds = array<i64: 1, 128>}, {transform_indices = @transform_7, window_bounds = array<i64: 16, 3>}]} {
    %c0 = arith.constant 0 : index
    %c0_0 = arith.constant 0 : index
    %0 = vector.load %arg1[%c0, %c0_0] : memref<16x32xbf16, #tpu.memory_space<vmem>>, vector<16x32xbf16>
    %c0_1 = arith.constant 0 : index
    %c0_2 = arith.constant 0 : index
    %1 = vector.load %arg2[%c0_1, %c0_2] : memref<32x512xbf16, #tpu.memory_space<vmem>>, vector<32x512xbf16>
    %cst = arith.constant dense<0.000000e+00> : vector<16x512xf32>
    %2 = tpu.matmul %0, %1, %cst {dimension_numbers = #tpu.dot_dimension_numbers<[1], [0], [0], [1], [0, 0, 1, 1], [], []>} : vector<16x32xbf16>, vector<32x512xbf16>, vector<16x512xf32> -> vector<16x512xf32>
    %c0_3 = arith.constant 0 : index
    %c0_4 = arith.constant 0 : index
    %3 = vector.load %arg3[%c0_3, %c0_4] : memref<1x512xf32, #tpu.memory_space<vmem>>, vector<1x512xf32>
    %4 = vector.broadcast %3 : vector<1x512xf32> to vector<16x512xf32>
    %5 = arith.addf %2, %4 : vector<16x512xf32>
    %cst_5 = arith.constant 0.000000e+00 : f32
    %6 = vector.broadcast %cst_5 : f32 to vector<16x512xf32>
    %7 = arith.maximumf %5, %6 : vector<16x512xf32>
    %8 = arith.truncf %7 : vector<16x512xf32> to vector<16x512xbf16>
    %c0_6 = arith.constant 0 : index
    %c0_7 = arith.constant 0 : index
    %9 = vector.load %arg4[%c0_6, %c0_7] : memref<512x512xbf16, #tpu.memory_space<vmem>>, vector<512x512xbf16>
    %cst_8 = arith.constant dense<0.000000e+00> : vector<16x512xf32>
    %10 = tpu.matmul %8, %9, %cst_8 {dimension_numbers = #tpu.dot_dimension_numbers<[1], [0], [0], [1], [0, 0, 1, 1], [], []>} : vector<16x512xbf16>, vector<512x512xbf16>, vector<16x512xf32> -> vector<16x512xf32>
    %c0_9 = arith.constant 0 : index
    %c0_10 = arith.constant 0 : index
    %11 = vector.load %arg5[%c0_9, %c0_10] : memref<1x512xf32, #tpu.memory_space<vmem>>, vector<1x512xf32>
    %12 = vector.broadcast %11 : vector<1x512xf32> to vector<16x512xf32>
    %13 = arith.addf %10, %12 : vector<16x512xf32>
    %cst_11 = arith.constant 0.000000e+00 : f32
    %14 = vector.broadcast %cst_11 : f32 to vector<16x512xf32>
    %15 = arith.maximumf %13, %14 : vector<16x512xf32>
    %16 = arith.truncf %15 : vector<16x512xf32> to vector<16x512xbf16>
    %c0_12 = arith.constant 0 : index
    %c0_13 = arith.constant 0 : index
    %17 = vector.load %arg6[%c0_12, %c0_13] : memref<512x128xbf16, #tpu.memory_space<vmem>>, vector<512x128xbf16>
    %cst_14 = arith.constant dense<0.000000e+00> : vector<16x128xf32>
    %18 = tpu.matmul %16, %17, %cst_14 {dimension_numbers = #tpu.dot_dimension_numbers<[1], [0], [0], [1], [0, 0, 1, 1], [], []>} : vector<16x512xbf16>, vector<512x128xbf16>, vector<16x128xf32> -> vector<16x128xf32>
    %c0_15 = arith.constant 0 : index
    %c0_16 = arith.constant 0 : index
    %19 = vector.load %arg7[%c0_15, %c0_16] : memref<1x128xf32, #tpu.memory_space<vmem>>, vector<1x128xf32>
    %20 = vector.broadcast %19 : vector<1x128xf32> to vector<16x128xf32>
    %21 = arith.addf %18, %20 : vector<16x128xf32>
    %22 = vector.extract_strided_slice %21 {offsets = [0, 0], sizes = [16, 3], strides = [1, 1]} : vector<16x128xf32> to vector<16x3xf32>
    %c0_17 = arith.constant 0 : index
    %c0_18 = arith.constant 0 : index
    %23 = vector.load %arg8[%c0_17, %c0_18] : memref<16x3xf32, #tpu.memory_space<vmem>>, vector<16x3xf32>
    tpu.vector_store %arg8[%c0_17, %c0_18], %22 {strides = array<i32>} : memref<16x3xf32, #tpu.memory_space<vmem>>, vector<16x3xf32>,
    return
  }
  func.func @transform_0(%arg0: i32) -> (i32, i32) {
    %c0_i32 = arith.constant 0 : i32
    %c0_i32_0 = arith.constant 0 : i32
    return %arg0, %c0_i32 : i32, i32
  }
  func.func @transform_1(%arg0: i32) -> (i32, i32) {
    %c0_i32 = arith.constant 0 : i32
    %c0_i32_0 = arith.constant 0 : i32
    %c0_i32_1 = arith.constant 0 : i32
    return %c0_i32, %c0_i32_0 : i32, i32
  }
  func.func @transform_2(%arg0: i32) -> (i32, i32) {
    %c0_i32 = arith.constant 0 : i32
    %c0_i32_0 = arith.constant 0 : i32
    %c0_i32_1 = arith.constant 0 : i32
    return %c0_i32, %c0_i32_0 : i32, i32
  }
  func.func @transform_3(%arg0: i32) -> (i32, i32) {
    %c0_i32 = arith.constant 0 : i32
    %c0_i32_0 = arith.constant 0 : i32
    %c0_i32_1 = arith.constant 0 : i32
    return %c0_i32, %c0_i32_0 : i32, i32
  }
  func.func @transform_4(%arg0: i32) -> (i32, i32) {
    %c0_i32 = arith.constant 0 : i32
    %c0_i32_0 = arith.constant 0 : i32
    %c0_i32_1 = arith.constant 0 : i32
    return %c0_i32, %c0_i32_0 : i32, i32
  }
  func.func @transform_5(%arg0: i32) -> (i32, i32) {
    %c0_i32 = arith.constant 0 : i32
    %c0_i32_0 = arith.constant 0 : i32
    %c0_i32_1 = arith.constant 0 : i32
    return %c0_i32, %c0_i32_0 : i32, i32
  }
  func.func @transform_6(%arg0: i32) -> (i32, i32) {
    %c0_i32 = arith.constant 0 : i32
    %c0_i32_0 = arith.constant 0 : i32
    %c0_i32_1 = arith.constant 0 : i32
    return %c0_i32, %c0_i32_0 : i32, i32
  }
  func.func @transform_7(%arg0: i32) -> (i32, i32) {
    %c0_i32 = arith.constant 0 : i32
    %c0_i32_0 = arith.constant 0 : i32
    return %arg0, %c0_i32 : i32, i32
  }
}

</mosaic_0001>

<llo_original>
// kernel: _forward.1
$region0: #{_forward.1}
  #allocation0 [shape = 'u32[]', space=smem, size = 0x4, offset = 0x4, fixed_abs, tag = 'smem constant byte address 0x4 - core index']
  #allocation1 [shape = 'u32[144,128]{1,0:T(1,128)}', space=vmem, size = 0x12000, scoped, tag = 'internal scratch']
  %s0 = inlined_call_operand.vmem [shape: bf16[16,32], index: 0, kind: input, shape index: {}]
  %s1 = inlined_call_operand.hbm [shape: bf16[32,512], index: 1, kind: input, shape index: {}]
  %s2 = inlined_call_operand.vmem [shape: f32[1,512], index: 2, kind: input, shape index: {}]
  %s3 = inlined_call_operand.hbm [shape: bf16[512,512], index: 3, kind: input, shape index: {}]
  %s4 = inlined_call_operand.vmem [shape: f32[1,512], index: 4, kind: input, shape index: {}]
  %s5 = inlined_call_operand.hbm [shape: bf16[512,128], index: 5, kind: input, shape index: {}]
  %s6 = inlined_call_operand.vmem [shape: f32[1,128], index: 6, kind: input, shape index: {}]
  %s7 = inlined_call_operand.vmem [shape: f32[16,3], index: 7, kind: output, shape index: {}]
  %s8 = sld [smem:[#allocation0]]
  $region50: #{_forward.1} parent=0
    _
  %s10 = ssub.s32 1, %s8
  %s11 = scalar_select 0, %s10, %s8
  $region1: #{_forward.1} parent=0
    #allocation2 [shape = 'u8[32768]{0}', space=vmem, size = 0x8000, scoped, tag = 'input window, operand 1, single buffered']
    #allocation3 [shape = 's32[1]{0}', space=sflag, size = 0x4, scoped, tag = 'scoped memory for _forward.1']
    #allocation4 [shape = 'u8[524288]{0}', space=vmem, size = 0x80000, scoped, tag = 'input window, operand 3, single buffered']
    #allocation5 [shape = 's32[1]{0}', space=sflag, size = 0x4, scoped, tag = 'scoped memory for _forward.1']
    #allocation6 [shape = 'u8[131072]{0}', space=vmem, size = 0x20000, scoped, tag = 'input window, operand 5, single buffered']
    %12 = vsyncpa [#allocation3], 0
    %13 = vsyncpa [#allocation5], 0
    // Predicated region
    $region2: #{_forward.1} parent=1 // pred_check
      _
    $region3: #{_forward.1} parent=1 // pred_check_branch
      %15 = sbr.rel (0) target = $region5
    $region4: #{_forward.1} parent=1 // pred_region
      _
    $region5: #{_forward.1} parent=1 // pred_fallthru
      _
    // Predicated region
    $region6: #{_forward.1} parent=1 // pred_check
      _
    $region7: #{_forward.1} parent=1 // pred_check_branch
      %17 = sbr.rel (0) target = $region9
    $region8: #{_forward.1} parent=1 // pred_region
      %s19 = ssub.s32 1024, 1024
      %20 = vsyncadd [#allocation3], %s19
      %s21 = sshll.u32 [#allocation2], 4
      %s22 = int_to_ptr.vmem [resolvable:$true] %s21
      %27 = dma.hbm_to_vmem [thread:$0]  %s1, 1024, %s22, [#allocation3], 256, 256, 16
    $region9: #{_forward.1} parent=1 // pred_fallthru
      _
    // Predicated region
    $region10: #{_forward.1} parent=1 // pred_check
      _
    $region11: #{_forward.1} parent=1 // pred_check_branch
      %29 = sbr.rel (0) target = $region13
    $region12: #{_forward.1} parent=1 // pred_region
      _
    $region13: #{_forward.1} parent=1 // pred_fallthru
      _
    // Predicated region
    $region14: #{_forward.1} parent=1 // pred_check
      _
    $region15: #{_forward.1} parent=1 // pred_check_branch
      %31 = sbr.rel (0) target = $region17
    $region16: #{_forward.1} parent=1 // pred_region
      %s33 = ssub.s32 16384, 16384
      %34 = vsyncadd [#allocation5], %s33
      %s35 = sshll.u32 [#allocation4], 4
      %s36 = int_to_ptr.vmem [resolvable:$true] %s35
      %41 = dma.hbm_to_vmem [thread:$0]  %s3, 16384, %s36, [#allocation5], 256, 256, 16
    $region17: #{_forward.1} parent=1 // pred_fallthru
      _
    // Predicated region
    $region18: #{_forward.1} parent=1 // pred_check
      _
    $region19: #{_forward.1} parent=1 // pred_check_branch
      %43 = sbr.rel (0) target = $region21
    $region20: #{_forward.1} parent=1 // pred_region
      _
    $region21: #{_forward.1} parent=1 // pred_fallthru
      _
    // Predicated region
    $region22: #{_forward.1} parent=1 // pred_check
      _
    $region23: #{_forward.1} parent=1 // pred_check_branch
      %45 = sbr.rel (0) target = $region25
    $region24: #{_forward.1} parent=1 // pred_region
      %s47 = ssub.s32 4096, 4096
      %48 = vsyncadd [#allocation5], %s47
      %s49 = sshll.u32 [#allocation6], 4
      %s50 = int_to_ptr.vmem [resolvable:$true] %s49
      %55 = dma.hbm_to_vmem [thread:$0]  %s5, 4096, %s50, [#allocation5], 64, 64, 4
    $region25: #{_forward.1} parent=1 // pred_fallthru
      _
    // Predicated region
    $region26: #{_forward.1} parent=1 // pred_check
      _
    $region27: #{_forward.1} parent=1 // pred_check_branch
      %57 = sbr.rel (0) target = $region29
    $region28: #{_forward.1} parent=1 // pred_region
      _
    $region29: #{_forward.1} parent=1 // pred_fallthru
      _
    // Predicated region
    $region30: #{_forward.1} parent=1 // pred_check
      _
    $region31: #{_forward.1} parent=1 // pred_check_branch
      %59 = sbr.rel (0) target = $region33
    $region32: #{_forward.1} parent=1 // pred_region
      %60 = dma.done [#allocation3], 1024
    $region33: #{_forward.1} parent=1 // pred_fallthru
      _
    // Predicated region
    $region34: #{_forward.1} parent=1 // pred_check
      _
    $region35: #{_forward.1} parent=1 // pred_check_branch
      %62 = sbr.rel (0) target = $region37
    $region36: #{_forward.1} parent=1 // pred_region
      %63 = dma.done [#allocation5], 16384
    $region37: #{_forward.1} parent=1 // pred_fallthru
      _
    // Predicated region
    $region38: #{_forward.1} parent=1 // pred_check
      _
    $region39: #{_forward.1} parent=1 // pred_check_branch
      %65 = sbr.rel (0) target = $region41
    $region40: #{_forward.1} parent=1 // pred_region
      %66 = dma.done [#allocation5], 4096
    $region41: #{_forward.1} parent=1 // pred_fallthru
      _
    %v68 = vld [vmem:[%s0] sm:$0xf]
    %v69 = vld [vmem:[%s0 + $0x4] sm:$0xf]
    %v70 = vld [vmem:[#allocation2] sm:$0xff]
    %v71 = vld [vmem:[#allocation2 + $0x8] sm:$0xff]
    %v72 = vld [vmem:[#allocation2 + $0x10] sm:$0xff]
    %v73 = vld [vmem:[#allocation2 + $0x18] sm:$0xff]
    %v74 = vld [vmem:[#allocation2 + $0x20] sm:$0xff]
    %v75 = vld [vmem:[#allocation2 + $0x28] sm:$0xff]
    %v76 = vld [vmem:[#allocation2 + $0x30] sm:$0xff]
    %v77 = vld [vmem:[#allocation2 + $0x38] sm:$0xff]
    %v78 = vld [vmem:[%s2] sm:$0xf]
    %v80 = vlaneseq
    %v81 = vshrl.u32 %v80, 7
    %v82 = vsub.s32 0, %v81
    %v83 = vrot.slane %v78, %v82
    %v84 = vlaneseq
    %v85 = vshrl.u32 %v84, 7
    %v86 = vsub.s32 1, %v85
    %v87 = vrot.slane %v78, %v86
    %v88 = vlaneseq
    %v89 = vshrl.u32 %v88, 7
    %v90 = vsub.s32 2, %v89
    %v91 = vrot.slane %v78, %v90
    %v92 = vlaneseq
    %v93 = vshrl.u32 %v92, 7
    %v94 = vsub.s32 3, %v93
    %v95 = vrot.slane %v78, %v94
    %v102 = vunpack.c.l.b16 %v68
    %v103 = vunpack.c.l.b16 %v69
    %v104 = vpack.c.b16 %v103, %v102
    %v113 = vunpack.c.l.b16 %v70
    %v114 = vunpack.c.h.b16 %v70
    %v115 = vunpack.c.l.b16 %v71
    %v116 = vunpack.c.h.b16 %v71
    %v117 = vunpack.c.l.b16 %v72
    %v118 = vunpack.c.h.b16 %v72
    %v119 = vunpack.c.l.b16 %v73
    %v120 = vunpack.c.h.b16 %v73
    %v121 = vunpack.c.l.b16 %v74
    %v122 = vunpack.c.h.b16 %v74
    %v123 = vunpack.c.l.b16 %v75
    %v124 = vunpack.c.h.b16 %v75
    %v125 = vunpack.c.l.b16 %v76
    %v126 = vunpack.c.h.b16 %v76
    %v127 = vunpack.c.l.b16 %v77
    %v128 = vunpack.c.h.b16 %v77
    %v129 = vpack.c.b16 %v117, %v113
    %v130 = vpack.c.b16 %v118, %v114
    %v131 = vpack.c.b16 %v119, %v115
    %v132 = vpack.c.b16 %v120, %v116
    %v133 = vpack.c.b16 %v125, %v121
    %v134 = vpack.c.b16 %v126, %v122
    %v135 = vpack.c.b16 %v127, %v123
    %v136 = vpack.c.b16 %v128, %v124
    %vm145 = vcmask 261120
    %v147 = vsel %vm145, %v104, 0
    %149 = vmatprep.subr.bf16.mxu0 0
    %150 = vmatpush1.bf16.msra.mxu0 0
    %151 = vmatprep.subr.bf16.mxu0 0
    %152 = vmatpush1.bf16.msra.mxu0 0
    %153 = vmatprep.subr.bf16.mxu0 0
    %154 = vmatpush1.bf16.msra.mxu0 0
    %155 = vmatprep.subr.bf16.mxu0 0
    %156 = vmatpush1.bf16.msra.mxu0 0
    %157 = vmatprep.subr.bf16.mxu0 0
    %158 = vmatpush1.bf16.msra.mxu0 0
    %159 = vmatprep.subr.bf16.mxu0 0
    %160 = vmatpush1.bf16.msra.mxu0 0
    %161 = vmatprep.subr.bf16.mxu0 %v134
    %162 = vmatpush1.bf16.msra.mxu0 %v133
    %163 = vmatprep.subr.bf16.mxu0 %v130
    %164 = vmatpush1.bf16.msra.mxu0 %v129
    %165 = vmatprep.subr.bf16.mxu0 0
    %166 = vmatpush2.bf16.msra.mxu0 0
    %167 = vmatprep.subr.bf16.mxu0 0
    %168 = vmatpush2.bf16.msra.mxu0 0
    %169 = vmatprep.subr.bf16.mxu0 0
    %170 = vmatpush2.bf16.msra.mxu0 0
    %171 = vmatprep.subr.bf16.mxu0 0
    %172 = vmatpush2.bf16.msra.mxu0 0
    %173 = vmatprep.subr.bf16.mxu0 0
    %174 = vmatpush2.bf16.msra.mxu0 0
    %175 = vmatprep.subr.bf16.mxu0 0
    %176 = vmatpush2.bf16.msra.mxu0 0
    %177 = vmatprep.subr.bf16.mxu0 0
    %178 = vmatpush2.bf16.msra.mxu0 0
    %179 = vmatprep.subr.bf16.mxu0 0
    %180 = vmatpush2.bf16.msra.mxu0 0
    %181 = vmatprep.mubr.bf16.mxu0 0
    %182 = vmatmul.mubr.bf16.gmra.mxu0 %v147
    %v183 = vpop.f32.mrf.mxu0
    %v184 = vadd.f32 %v83, %v183
    %v185 = vpop.f32.mrf.mxu0
    %v186 = vadd.f32 %v87, %v185
    %v187 = vpop.f32.mrf.mxu0
    %v188 = vadd.f32 %v83, %v187
    %v189 = vpop.f32.mrf.mxu0
    %v190 = vadd.f32 %v87, %v189
    %191 = vdwg.mxu0
    %192 = vmatprep.subr.bf16.mxu0 0
    %193 = vmatpush1.bf16.msra.mxu0 0
    %194 = vmatprep.subr.bf16.mxu0 0
    %195 = vmatpush1.bf16.msra.mxu0 0
    %196 = vmatprep.subr.bf16.mxu0 0
    %197 = vmatpush1.bf16.msra.mxu0 0
    %198 = vmatprep.subr.bf16.mxu0 0
    %199 = vmatpush1.bf16.msra.mxu0 0
    %200 = vmatprep.subr.bf16.mxu0 0
    %201 = vmatpush1.bf16.msra.mxu0 0
    %202 = vmatprep.subr.bf16.mxu0 0
    %203 = vmatpush1.bf16.msra.mxu0 0
    %204 = vmatprep.subr.bf16.mxu0 %v136
    %205 = vmatpush1.bf16.msra.mxu0 %v135
    %206 = vmatprep.subr.bf16.mxu0 %v132
    %207 = vmatpush1.bf16.msra.mxu0 %v131
    %208 = vmatprep.subr.bf16.mxu0 0
    %209 = vmatpush2.bf16.msra.mxu0 0
    %210 = vmatprep.subr.bf16.mxu0 0
    %211 = vmatpush2.bf16.msra.mxu0 0
    %212 = vmatprep.subr.bf16.mxu0 0
    %213 = vmatpush2.bf16.msra.mxu0 0
    %214 = vmatprep.subr.bf16.mxu0 0
    %215 = vmatpush2.bf16.msra.mxu0 0
    %216 = vmatprep.subr.bf16.mxu0 0
    %217 = vmatpush2.bf16.msra.mxu0 0
    %218 = vmatprep.subr.bf16.mxu0 0
    %219 = vmatpush2.bf16.msra.mxu0 0
    %220 = vmatprep.subr.bf16.mxu0 0
    %221 = vmatpush2.bf16.msra.mxu0 0
    %222 = vmatprep.subr.bf16.mxu0 0
    %223 = vmatpush2.bf16.msra.mxu0 0
    %224 = vmatprep.mubr.bf16.mxu0 0
    %225 = vmatmul.mubr.bf16.gmra.mxu0 %v147
    %v226 = vpop.f32.mrf.mxu0
    %v227 = vadd.f32 %v91, %v226
    %v228 = vpop.f32.mrf.mxu0
    %v229 = vadd.f32 %v95, %v228
    %v230 = vpop.f32.mrf.mxu0
    %v231 = vadd.f32 %v91, %v230
    %v232 = vpop.f32.mrf.mxu0
    %v233 = vadd.f32 %v95, %v232
    %234 = vdwg.mxu0
    %v235 = vmax.f32 %v184, 0.0
    %v236 = vmax.f32 %v186, 0.0
    %v237 = vmax.f32 %v227, 0.0
    %v238 = vmax.f32 %v229, 0.0
    %v239 = vmax.f32 %v188, 0.0
    %v240 = vmax.f32 %v190, 0.0
    %v241 = vmax.f32 %v231, 0.0
    %v242 = vmax.f32 %v233, 0.0
    %v243 = vpack.c.bf16 %v239, %v235
    %v244 = vpack.c.bf16 %v240, %v236
    %v245 = vpack.c.bf16 %v241, %v237
    %v246 = vpack.c.bf16 %v242, %v238
    %v247 = vld [vmem:[#allocation4] sm:$0xff]
    %v248 = vld [vmem:[#allocation4 + $0x8] sm:$0xff]
    %v249 = vld [vmem:[#allocation4 + $0x10] sm:$0xff]
    %v250 = vld [vmem:[#allocation4 + $0x18] sm:$0xff]
    %v251 = vld [vmem:[#allocation4 + $0x20] sm:$0xff]
    %v252 = vld [vmem:[#allocation4 + $0x28] sm:$0xff]
    %v253 = vld [vmem:[#allocation4 + $0x30] sm:$0xff]
    %v254 = vld [vmem:[#allocation4 + $0x38] sm:$0xff]
    %v255 = vld [vmem:[#allocation4 + $0x40] sm:$0xff]
    %v256 = vld [vmem:[#allocation4 + $0x48] sm:$0xff]
    %v257 = vld [vmem:[#allocation4 + $0x50] sm:$0xff]
    %v258 = vld [vmem:[#allocation4 + $0x58] sm:$0xff]
    %v259 = vld [vmem:[#allocation4 + $0x60] sm:$0xff]
    %v260 = vld [vmem:[#allocation4 + $0x68] sm:$0xff]
    %v261 = vld [vmem:[#allocation4 + $0x70] sm:$0xff]
    %v262 = vld [vmem:[#allocation4 + $0x78] sm:$0xff]
    %v263 = vld [vmem:[#allocation4 + $0x80] sm:$0xff]
    %v264 = vld [vmem:[#allocation4 + $0x88] sm:$0xff]
    %v265 = vld [vmem:[#allocation4 + $0x90] sm:$0xff]
    %v266 = vld [vmem:[#allocation4 + $0x98] sm:$0xff]
    %v267 = vld [vmem:[#allocation4 + $0xa0] sm:$0xff]
    %v268 = vld [vmem:[#allocation4 + $0xa8] sm:$0xff]
    %v269 = vld [vmem:[#allocation4 + $0xb0] sm:$0xff]
    %v270 = vld [vmem:[#allocation4 + $0xb8] sm:$0xff]
    %v271 = vld [vmem:[#allocation4 + $0xc0] sm:$0xff]
    %v272 = vld [vmem:[#allocation4 + $0xc8] sm:$0xff]
    %v273 = vld [vmem:[#allocation4 + $0xd0] sm:$0xff]
    %v274 = vld [vmem:[#allocation4 + $0xd8] sm:$0xff]
    %v275 = vld [vmem:[#allocation4 + $0xe0] sm:$0xff]
    %v276 = vld [vmem:[#allocation4 + $0xe8] sm:$0xff]
    %v277 = vld [vmem:[#allocation4 + $0xf0] sm:$0xff]
    %v278 = vld [vmem:[#allocation4 + $0xf8] sm:$0xff]
    %v279 = vld [vmem:[#allocation4 + $0x100] sm:$0xff]
    %v280 = vld [vmem:[#allocation4 + $0x108] sm:$0xff]
    %v281 = vld [vmem:[#allocation4 + $0x110] sm:$0xff]
    %v282 = vld [vmem:[#allocation4 + $0x118] sm:$0xff]
    %v283 = vld [vmem:[#allocation4 + $0x120] sm:$0xff]
    %v284 = vld [vmem:[#allocation4 + $0x128] sm:$0xff]
    %v285 = vld [vmem:[#allocation4 + $0x130] sm:$0xff]
    %v286 = vld [vmem:[#allocation4 + $0x138] sm:$0xff]
    %v287 = vld [vmem:[#allocation4 + $0x140] sm:$0xff]
    %v288 = vld [vmem:[#allocation4 + $0x148] sm:$0xff]
    %v289 = vld [vmem:[#allocation4 + $0x150] sm:$0xff]
    %v290 = vld [vmem:[#allocation4 + $0x158] sm:$0xff]
    %v291 = vld [vmem:[#allocation4 + $0x160] sm:$0xff]
    %v292 = vld [vmem:[#allocation4 + $0x168] sm:$0xff]
    %v293 = vld [vmem:[#allocation4 + $0x170] sm:$0xff]
    %v294 = vld [vmem:[#allocation4 + $0x178] sm:$0xff]
    %v295 = vld [vmem:[#allocation4 + $0x180] sm:$0xff]
    %v296 = vld [vmem:[#allocation4 + $0x188] sm:$0xff]
    %v297 = vld [vmem:[#allocation4 + $0x190] sm:$0xff]
    %v298 = vld [vmem:[#allocation4 + $0x198] sm:$0xff]
    %v299 = vld [vmem:[#allocation4 + $0x1a0] sm:$0xff]
    %v300 = vld [vmem:[#allocation4 + $0x1a8] sm:$0xff]
    %v301 = vld [vmem:[#allocation4 + $0x1b0] sm:$0xff]
    %v302 = vld [vmem:[#allocation4 + $0x1b8] sm:$0xff]
    %v303 = vld [vmem:[#allocation4 + $0x1c0] sm:$0xff]
    %v304 = vld [vmem:[#allocation4 + $0x1c8] sm:$0xff]
    %v305 = vld [vmem:[#allocation4 + $0x1d0] sm:$0xff]
    %v306 = vld [vmem:[#allocation4 + $0x1d8] sm:$0xff]
    %v307 = vld [vmem:[#allocation4 + $0x1e0] sm:$0xff]
    %v308 = vld [vmem:[#allocation4 + $0x1e8] sm:$0xff]
    %v309 = vld [vmem:[#allocation4 + $0x1f0] sm:$0xff]
    %v310 = vld [vmem:[#allocation4 + $0x1f8] sm:$0xff]
    %v311 = vld [vmem:[#allocation4 + $0x200] sm:$0xff]
    %v312 = vld [vmem:[#allocation4 + $0x208] sm:$0xff]
    %v313 = vld [vmem:[#allocation4 + $0x210] sm:$0xff]
    %v314 = vld [vmem:[#allocation4 + $0x218] sm:$0xff]
    %v315 = vld [vmem:[#allocation4 + $0x220] sm:$0xff]
    %v316 = vld [vmem:[#allocation4 + $0x228] sm:$0xff]
    %v317 = vld [vmem:[#allocation4 + $0x230] sm:$0xff]
    %v318 = vld [vmem:[#allocation4 + $0x238] sm:$0xff]
    %v319 = vld [vmem:[#allocation4 + $0x240] sm:$0xff]
    %v320 = vld [vmem:[#allocation4 + $0x248] sm:$0xff]
    %v321 = vld [vmem:[#allocation4 + $0x250] sm:$0xff]
    %v322 = vld [vmem:[#allocation4 + $0x258] sm:$0xff]
    %v323 = vld [vmem:[#allocation4 + $0x260] sm:$0xff]
    %v324 = vld [vmem:[#allocation4 + $0x268] sm:$0xff]
    %v325 = vld [vmem:[#allocation4 + $0x270] sm:$0xff]
    %v326 = vld [vmem:[#allocation4 + $0x278] sm:$0xff]
    %v327 = vld [vmem:[#allocation4 + $0x280] sm:$0xff]
    %v328 = vld [vmem:[#allocation4 + $0x288] sm:$0xff]
    %v329 = vld [vmem:[#allocation4 + $0x290] sm:$0xff]
    %v330 = vld [vmem:[#allocation4 + $0x298] sm:$0xff]
    %v331 = vld [vmem:[#allocation4 + $0x2a0] sm:$0xff]
    %v332 = vld [vmem:[#allocation4 + $0x2a8] sm:$0xff]
    %v333 = vld [vmem:[#allocation4 + $0x2b0] sm:$0xff]
    %v334 = vld [vmem:[#allocation4 + $0x2b8] sm:$0xff]
    %v335 = vld [vmem:[#allocation4 + $0x2c0] sm:$0xff]
    %v336 = vld [vmem:[#allocation4 + $0x2c8] sm:$0xff]
    %v337 = vld [vmem:[#allocation4 + $0x2d0] sm:$0xff]
    %v338 = vld [vmem:[#allocation4 + $0x2d8] sm:$0xff]
    %v339 = vld [vmem:[#allocation4 + $0x2e0] sm:$0xff]
    %v340 = vld [vmem:[#allocation4 + $0x2e8] sm:$0xff]
    %v341 = vld [vmem:[#allocation4 + $0x2f0] sm:$0xff]
    %v342 = vld [vmem:[#allocation4 + $0x2f8] sm:$0xff]
    %v343 = vld [vmem:[#allocation4 + $0x300] sm:$0xff]
    %v344 = vld [vmem:[#allocation4 + $0x308] sm:$0xff]
    %v345 = vld [vmem:[#allocation4 + $0x310] sm:$0xff]
    %v346 = vld [vmem:[#allocation4 + $0x318] sm:$0xff]
    %v347 = vld [vmem:[#allocation4 + $0x320] sm:$0xff]
    %v348 = vld [vmem:[#allocation4 + $0x328] sm:$0xff]
    %v349 = vld [vmem:[#allocation4 + $0x330] sm:$0xff]
    %v350 = vld [vmem:[#allocation4 + $0x338] sm:$0xff]
    %v351 = vld [vmem:[#allocation4 + $0x340] sm:$0xff]
    %v352 = vld [vmem:[#allocation4 + $0x348] sm:$0xff]
    %v353 = vld [vmem:[#allocation4 + $0x350] sm:$0xff]
    %v354 = vld [vmem:[#allocation4 + $0x358] sm:$0xff]
    %v355 = vld [vmem:[#allocation4 + $0x360] sm:$0xff]
    %v356 = vld [vmem:[#allocation4 + $0x368] sm:$0xff]
    %v357 = vld [vmem:[#allocation4 + $0x370] sm:$0xff]
    %v358 = vld [vmem:[#allocation4 + $0x378] sm:$0xff]
    %v359 = vld [vmem:[#allocation4 + $0x380] sm:$0xff]
    %v360 = vld [vmem:[#allocation4 + $0x388] sm:$0xff]
    %v361 = vld [vmem:[#allocation4 + $0x390] sm:$0xff]
    %v362 = vld [vmem:[#allocation4 + $0x398] sm:$0xff]
    %v363 = vld [vmem:[#allocation4 + $0x3a0] sm:$0xff]
    %v364 = vld [vmem:[#allocation4 + $0x3a8] sm:$0xff]
    %v365 = vld [vmem:[#allocation4 + $0x3b0] sm:$0xff]
    %v366 = vld [vmem:[#allocation4 + $0x3b8] sm:$0xff]
    %v367 = vld [vmem:[#allocation4 + $0x3c0] sm:$0xff]
    %v368 = vld [vmem:[#allocation4 + $0x3c8] sm:$0xff]
    %v369 = vld [vmem:[#allocation4 + $0x3d0] sm:$0xff]
    %v370 = vld [vmem:[#allocation4 + $0x3d8] sm:$0xff]
    %v371 = vld [vmem:[#allocation4 + $0x3e0] sm:$0xff]
    %v372 = vld [vmem:[#allocation4 + $0x3e8] sm:$0xff]
    %v373 = vld [vmem:[#allocation4 + $0x3f0] sm:$0xff]
    %v374 = vld [vmem:[#allocation4 + $0x3f8] sm:$0xff]
    %v375 = vld [vmem:[%s4] sm:$0xf]
    %v377 = vlaneseq
    %v378 = vshrl.u32 %v377, 7
    %v379 = vsub.s32 0, %v378
    %v380 = vrot.slane %v375, %v379
    %v381 = vlaneseq
    %v382 = vshrl.u32 %v381, 7
    %v383 = vsub.s32 1, %v382
    %v384 = vrot.slane %v375, %v383
    %v385 = vlaneseq
    %v386 = vshrl.u32 %v385, 7
    %v387 = vsub.s32 2, %v386
    %v388 = vrot.slane %v375, %v387
    %v389 = vlaneseq
    %v390 = vshrl.u32 %v389, 7
    %v391 = vsub.s32 3, %v390
    %v392 = vrot.slane %v375, %v391
    %v525 = vunpack.c.l.b16 %v247
    %v526 = vunpack.c.h.b16 %v247
    %v527 = vunpack.c.l.b16 %v248
    %v528 = vunpack.c.h.b16 %v248
    %v529 = vunpack.c.l.b16 %v249
    %v530 = vunpack.c.h.b16 %v249
    %v531 = vunpack.c.l.b16 %v250
    %v532 = vunpack.c.h.b16 %v250
    %v533 = vunpack.c.l.b16 %v251
    %v534 = vunpack.c.h.b16 %v251
    %v535 = vunpack.c.l.b16 %v252
    %v536 = vunpack.c.h.b16 %v252
    %v537 = vunpack.c.l.b16 %v253
    %v538 = vunpack.c.h.b16 %v253
    %v539 = vunpack.c.l.b16 %v254
    %v540 = vunpack.c.h.b16 %v254
    %v541 = vunpack.c.l.b16 %v255
    %v542 = vunpack.c.h.b16 %v255
    %v543 = vunpack.c.l.b16 %v256
    %v544 = vunpack.c.h.b16 %v256
    %v545 = vunpack.c.l.b16 %v257
    %v546 = vunpack.c.h.b16 %v257
    %v547 = vunpack.c.l.b16 %v258
    %v548 = vunpack.c.h.b16 %v258
    %v549 = vunpack.c.l.b16 %v259
    %v550 = vunpack.c.h.b16 %v259
    %v551 = vunpack.c.l.b16 %v260
    %v552 = vunpack.c.h.b16 %v260
    %v553 = vunpack.c.l.b16 %v261
    %v554 = vunpack.c.h.b16 %v261
    %v555 = vunpack.c.l.b16 %v262
    %v556 = vunpack.c.h.b16 %v262
    %v557 = vunpack.c.l.b16 %v263
    %v558 = vunpack.c.h.b16 %v263
    %v559 = vunpack.c.l.b16 %v264
    %v560 = vunpack.c.h.b16 %v264
    %v561 = vunpack.c.l.b16 %v265
    %v562 = vunpack.c.h.b16 %v265
    %v563 = vunpack.c.l.b16 %v266
    %v564 = vunpack.c.h.b16 %v266
    %v565 = vunpack.c.l.b16 %v267
    %v566 = vunpack.c.h.b16 %v267
    %v567 = vunpack.c.l.b16 %v268
    %v568 = vunpack.c.h.b16 %v268
    %v569 = vunpack.c.l.b16 %v269
    %v570 = vunpack.c.h.b16 %v269
    %v571 = vunpack.c.l.b16 %v270
    %v572 = vunpack.c.h.b16 %v270
    %v573 = vunpack.c.l.b16 %v271
    %v574 = vunpack.c.h.b16 %v271
    %v575 = vunpack.c.l.b16 %v272
    %v576 = vunpack.c.h.b16 %v272
    %v577 = vunpack.c.l.b16 %v273
    %v578 = vunpack.c.h.b16 %v273
    %v579 = vunpack.c.l.b16 %v274
    %v580 = vunpack.c.h.b16 %v274
    %v581 = vunpack.c.l.b16 %v275
    %v582 = vunpack.c.h.b16 %v275
    %v583 = vunpack.c.l.b16 %v276
    %v584 = vunpack.c.h.b16 %v276
    %v585 = vunpack.c.l.b16 %v277
    %v586 = vunpack.c.h.b16 %v277
    %v587 = vunpack.c.l.b16 %v278
    %v588 = vunpack.c.h.b16 %v278
    %v589 = vunpack.c.l.b16 %v279
    %v590 = vunpack.c.h.b16 %v279
    %v591 = vunpack.c.l.b16 %v280
    %v592 = vunpack.c.h.b16 %v280
    %v593 = vunpack.c.l.b16 %v281
    %v594 = vunpack.c.h.b16 %v281
    %v595 = vunpack.c.l.b16 %v282
    %v596 = vunpack.c.h.b16 %v282
    %v597 = vunpack.c.l.b16 %v283
    %v598 = vunpack.c.h.b16 %v283
    %v599 = vunpack.c.l.b16 %v284
    %v600 = vunpack.c.h.b16 %v284
    %v601 = vunpack.c.l.b16 %v285
    %v602 = vunpack.c.h.b16 %v285
    %v603 = vunpack.c.l.b16 %v286
    %v604 = vunpack.c.h.b16 %v286
    %v605 = vunpack.c.l.b16 %v287
    %v606 = vunpack.c.h.b16 %v287
    %v607 = vunpack.c.l.b16 %v288
    %v608 = vunpack.c.h.b16 %v288
    %v609 = vunpack.c.l.b16 %v289
    %v610 = vunpack.c.h.b16 %v289
    %v611 = vunpack.c.l.b16 %v290
    %v612 = vunpack.c.h.b16 %v290
    %v613 = vunpack.c.l.b16 %v291
    %v614 = vunpack.c.h.b16 %v291
    %v615 = vunpack.c.l.b16 %v292
    %v616 = vunpack.c.h.b16 %v292
    %v617 = vunpack.c.l.b16 %v293
    %v618 = vunpack.c.h.b16 %v293
    %v619 = vunpack.c.l.b16 %v294
    %v620 = vunpack.c.h.b16 %v294
    %v621 = vunpack.c.l.b16 %v295
    %v622 = vunpack.c.h.b16 %v295
    %v623 = vunpack.c.l.b16 %v296
    %v624 = vunpack.c.h.b16 %v296
    %v625 = vunpack.c.l.b16 %v297
    %v626 = vunpack.c.h.b16 %v297
    %v627 = vunpack.c.l.b16 %v298
    %v628 = vunpack.c.h.b16 %v298
    %v629 = vunpack.c.l.b16 %v299
    %v630 = vunpack.c.h.b16 %v299
    %v631 = vunpack.c.l.b16 %v300
    %v632 = vunpack.c.h.b16 %v300
    %v633 = vunpack.c.l.b16 %v301
    %v634 = vunpack.c.h.b16 %v301
    %v635 = vunpack.c.l.b16 %v302
    %v636 = vunpack.c.h.b16 %v302
    %v637 = vunpack.c.l.b16 %v303
    %v638 = vunpack.c.h.b16 %v303
    %v639 = vunpack.c.l.b16 %v304
    %v640 = vunpack.c.h.b16 %v304
    %v641 = vunpack.c.l.b16 %v305
    %v642 = vunpack.c.h.b16 %v305
    %v643 = vunpack.c.l.b16 %v306
    %v644 = vunpack.c.h.b16 %v306
    %v645 = vunpack.c.l.b16 %v307
    %v646 = vunpack.c.h.b16 %v307
    %v647 = vunpack.c.l.b16 %v308
    %v648 = vunpack.c.h.b16 %v308
    %v649 = vunpack.c.l.b16 %v309
    %v650 = vunpack.c.h.b16 %v309
    %v651 = vunpack.c.l.b16 %v310
    %v652 = vunpack.c.h.b16 %v310
    %v653 = vunpack.c.l.b16 %v311
    %v654 = vunpack.c.h.b16 %v311
    %v655 = vunpack.c.l.b16 %v312
    %v656 = vunpack.c.h.b16 %v312
    %v657 = vunpack.c.l.b16 %v313
    %v658 = vunpack.c.h.b16 %v313
    %v659 = vunpack.c.l.b16 %v314
    %v660 = vunpack.c.h.b16 %v314
    %v661 = vunpack.c.l.b16 %v315
    %v662 = vunpack.c.h.b16 %v315
    %v663 = vunpack.c.l.b16 %v316
    %v664 = vunpack.c.h.b16 %v316
    %v665 = vunpack.c.l.b16 %v317
    %v666 = vunpack.c.h.b16 %v317
    %v667 = vunpack.c.l.b16 %v318
    %v668 = vunpack.c.h.b16 %v318
    %v669 = vunpack.c.l.b16 %v319
    %v670 = vunpack.c.h.b16 %v319
    %v671 = vunpack.c.l.b16 %v320
    %v672 = vunpack.c.h.b16 %v320
    %v673 = vunpack.c.l.b16 %v321
    %v674 = vunpack.c.h.b16 %v321
    %v675 = vunpack.c.l.b16 %v322
    %v676 = vunpack.c.h.b16 %v322
    %v677 = vunpack.c.l.b16 %v323
    %v678 = vunpack.c.h.b16 %v323
    %v679 = vunpack.c.l.b16 %v324
    %v680 = vunpack.c.h.b16 %v324
    %v681 = vunpack.c.l.b16 %v325
    %v682 = vunpack.c.h.b16 %v325
    %v683 = vunpack.c.l.b16 %v326
    %v684 = vunpack.c.h.b16 %v326
    %v685 = vunpack.c.l.b16 %v327
    %v686 = vunpack.c.h.b16 %v327
    %v687 = vunpack.c.l.b16 %v328
    %v688 = vunpack.c.h.b16 %v328
    %v689 = vunpack.c.l.b16 %v329
    %v690 = vunpack.c.h.b16 %v329
    %v691 = vunpack.c.l.b16 %v330
    %v692 = vunpack.c.h.b16 %v330
    %v693 = vunpack.c.l.b16 %v331
    %v694 = vunpack.c.h.b16 %v331
    %v695 = vunpack.c.l.b16 %v332
    %v696 = vunpack.c.h.b16 %v332
    %v697 = vunpack.c.l.b16 %v333
    %v698 = vunpack.c.h.b16 %v333
    %v699 = vunpack.c.l.b16 %v334
    %v700 = vunpack.c.h.b16 %v334
    %v701 = vunpack.c.l.b16 %v335
    %v702 = vunpack.c.h.b16 %v335
    %v703 = vunpack.c.l.b16 %v336
    %v704 = vunpack.c.h.b16 %v336
    %v705 = vunpack.c.l.b16 %v337
    %v706 = vunpack.c.h.b16 %v337
    %v707 = vunpack.c.l.b16 %v338
    %v708 = vunpack.c.h.b16 %v338
    %v709 = vunpack.c.l.b16 %v339
    %v710 = vunpack.c.h.b16 %v339
    %v711 = vunpack.c.l.b16 %v340
    %v712 = vunpack.c.h.b16 %v340
    %v713 = vunpack.c.l.b16 %v341
    %v714 = vunpack.c.h.b16 %v341
    %v715 = vunpack.c.l.b16 %v342
    %v716 = vunpack.c.h.b16 %v342
    %v717 = vunpack.c.l.b16 %v343
    %v718 = vunpack.c.h.b16 %v343
    %v719 = vunpack.c.l.b16 %v344
    %v720 = vunpack.c.h.b16 %v344
    %v721 = vunpack.c.l.b16 %v345
    %v722 = vunpack.c.h.b16 %v345
    %v723 = vunpack.c.l.b16 %v346
    %v724 = vunpack.c.h.b16 %v346
    %v725 = vunpack.c.l.b16 %v347
    %v726 = vunpack.c.h.b16 %v347
    %v727 = vunpack.c.l.b16 %v348
    %v728 = vunpack.c.h.b16 %v348
    %v729 = vunpack.c.l.b16 %v349
    %v730 = vunpack.c.h.b16 %v349
    %v731 = vunpack.c.l.b16 %v350
    %v732 = vunpack.c.h.b16 %v350
    %v733 = vunpack.c.l.b16 %v351
    %v734 = vunpack.c.h.b16 %v351
    %v735 = vunpack.c.l.b16 %v352
    %v736 = vunpack.c.h.b16 %v352
    %v737 = vunpack.c.l.b16 %v353
    %v738 = vunpack.c.h.b16 %v353
    %v739 = vunpack.c.l.b16 %v354
    %v740 = vunpack.c.h.b16 %v354
    %v741 = vunpack.c.l.b16 %v355
    %v742 = vunpack.c.h.b16 %v355
    %v743 = vunpack.c.l.b16 %v356
    %v744 = vunpack.c.h.b16 %v356
    %v745 = vunpack.c.l.b16 %v357
    %v746 = vunpack.c.h.b16 %v357
    %v747 = vunpack.c.l.b16 %v358
    %v748 = vunpack.c.h.b16 %v358
    %v749 = vunpack.c.l.b16 %v359
    %v750 = vunpack.c.h.b16 %v359
    %v751 = vunpack.c.l.b16 %v360
    %v752 = vunpack.c.h.b16 %v360
    %v753 = vunpack.c.l.b16 %v361
    %v754 = vunpack.c.h.b16 %v361
    %v755 = vunpack.c.l.b16 %v362
    %v756 = vunpack.c.h.b16 %v362
    %v757 = vunpack.c.l.b16 %v363
    %v758 = vunpack.c.h.b16 %v363
    %v759 = vunpack.c.l.b16 %v364
    %v760 = vunpack.c.h.b16 %v364
    %v761 = vunpack.c.l.b16 %v365
    %v762 = vunpack.c.h.b16 %v365
    %v763 = vunpack.c.l.b16 %v366
    %v764 = vunpack.c.h.b16 %v366
    %v765 = vunpack.c.l.b16 %v367
    %v766 = vunpack.c.h.b16 %v367
    %v767 = vunpack.c.l.b16 %v368
    %v768 = vunpack.c.h.b16 %v368
    %v769 = vunpack.c.l.b16 %v369
    %v770 = vunpack.c.h.b16 %v369
    %v771 = vunpack.c.l.b16 %v370
    %v772 = vunpack.c.h.b16 %v370
    %v773 = vunpack.c.l.b16 %v371
    %v774 = vunpack.c.h.b16 %v371
    %v775 = vunpack.c.l.b16 %v372
    %v776 = vunpack.c.h.b16 %v372
    %v777 = vunpack.c.l.b16 %v373
    %v778 = vunpack.c.h.b16 %v373
    %v779 = vunpack.c.l.b16 %v374
    %v780 = vunpack.c.h.b16 %v374
    %v781 = vpack.c.b16 %v529, %v525
    %v782 = vpack.c.b16 %v530, %v526
    %v783 = vpack.c.b16 %v531, %v527
    %v784 = vpack.c.b16 %v532, %v528
    %v785 = vpack.c.b16 %v537, %v533
    %v786 = vpack.c.b16 %v538, %v534
    %v787 = vpack.c.b16 %v539, %v535
    %v788 = vpack.c.b16 %v540, %v536
    %v789 = vpack.c.b16 %v545, %v541
    %v790 = vpack.c.b16 %v546, %v542
    %v791 = vpack.c.b16 %v547, %v543
    %v792 = vpack.c.b16 %v548, %v544
    %v793 = vpack.c.b16 %v553, %v549
    %v794 = vpack.c.b16 %v554, %v550
    %v795 = vpack.c.b16 %v555, %v551
    %v796 = vpack.c.b16 %v556, %v552
    %v797 = vpack.c.b16 %v561, %v557
    %v798 = vpack.c.b16 %v562, %v558
    %v799 = vpack.c.b16 %v563, %v559
    %v800 = vpack.c.b16 %v564, %v560
    %v801 = vpack.c.b16 %v569, %v565
    %v802 = vpack.c.b16 %v570, %v566
    %v803 = vpack.c.b16 %v571, %v567
    %v804 = vpack.c.b16 %v572, %v568
    %v805 = vpack.c.b16 %v577, %v573
    %v806 = vpack.c.b16 %v578, %v574
    %v807 = vpack.c.b16 %v579, %v575
    %v808 = vpack.c.b16 %v580, %v576
    %v809 = vpack.c.b16 %v585, %v581
    %v810 = vpack.c.b16 %v586, %v582
    %v811 = vpack.c.b16 %v587, %v583
    %v812 = vpack.c.b16 %v588, %v584
    %v813 = vpack.c.b16 %v593, %v589
    %v814 = vpack.c.b16 %v594, %v590
    %v815 = vpack.c.b16 %v595, %v591
    %v816 = vpack.c.b16 %v596, %v592
    %v817 = vpack.c.b16 %v601, %v597
    %v818 = vpack.c.b16 %v602, %v598
    %v819 = vpack.c.b16 %v603, %v599
    %v820 = vpack.c.b16 %v604, %v600
    %v821 = vpack.c.b16 %v609, %v605
    %v822 = vpack.c.b16 %v610, %v606
    %v823 = vpack.c.b16 %v611, %v607
    %v824 = vpack.c.b16 %v612, %v608
    %v825 = vpack.c.b16 %v617, %v613
    %v826 = vpack.c.b16 %v618, %v614
    %v827 = vpack.c.b16 %v619, %v615
    %v828 = vpack.c.b16 %v620, %v616
    %v829 = vpack.c.b16 %v625, %v621
    %v830 = vpack.c.b16 %v626, %v622
    %v831 = vpack.c.b16 %v627, %v623
    %v832 = vpack.c.b16 %v628, %v624
    %v833 = vpack.c.b16 %v633, %v629
    %v834 = vpack.c.b16 %v634, %v630
    %v835 = vpack.c.b16 %v635, %v631
    %v836 = vpack.c.b16 %v636, %v632
    %v837 = vpack.c.b16 %v641, %v637
    %v838 = vpack.c.b16 %v642, %v638
    %v839 = vpack.c.b16 %v643, %v639
    %v840 = vpack.c.b16 %v644, %v640
    %v841 = vpack.c.b16 %v649, %v645
    %v842 = vpack.c.b16 %v650, %v646
    %v843 = vpack.c.b16 %v651, %v647
    %v844 = vpack.c.b16 %v652, %v648
    %v845 = vpack.c.b16 %v657, %v653
    %v846 = vpack.c.b16 %v658, %v654
    %v847 = vpack.c.b16 %v659, %v655
    %v848 = vpack.c.b16 %v660, %v656
    %v849 = vpack.c.b16 %v665, %v661
    %v850 = vpack.c.b16 %v666, %v662
    %v851 = vpack.c.b16 %v667, %v663
    %v852 = vpack.c.b16 %v668, %v664
    %v853 = vpack.c.b16 %v673, %v669
    %v854 = vpack.c.b16 %v674, %v670
    %v855 = vpack.c.b16 %v675, %v671
    %v856 = vpack.c.b16 %v676, %v672
    %v857 = vpack.c.b16 %v681, %v677
    %v858 = vpack.c.b16 %v682, %v678
    %v859 = vpack.c.b16 %v683, %v679
    %v860 = vpack.c.b16 %v684, %v680
    %v861 = vpack.c.b16 %v689, %v685
    %v862 = vpack.c.b16 %v690, %v686
    %v863 = vpack.c.b16 %v691, %v687
    %v864 = vpack.c.b16 %v692, %v688
    %v865 = vpack.c.b16 %v697, %v693
    %v866 = vpack.c.b16 %v698, %v694
    %v867 = vpack.c.b16 %v699, %v695
    %v868 = vpack.c.b16 %v700, %v696
    %v869 = vpack.c.b16 %v705, %v701
    %v870 = vpack.c.b16 %v706, %v702
    %v871 = vpack.c.b16 %v707, %v703
    %v872 = vpack.c.b16 %v708, %v704
    %v873 = vpack.c.b16 %v713, %v709
    %v874 = vpack.c.b16 %v714, %v710
    %v875 = vpack.c.b16 %v715, %v711
    %v876 = vpack.c.b16 %v716, %v712
    %v877 = vpack.c.b16 %v721, %v717
    %v878 = vpack.c.b16 %v722, %v718
    %v879 = vpack.c.b16 %v723, %v719
    %v880 = vpack.c.b16 %v724, %v720
    %v881 = vpack.c.b16 %v729, %v725
    %v882 = vpack.c.b16 %v730, %v726
    %v883 = vpack.c.b16 %v731, %v727
    %v884 = vpack.c.b16 %v732, %v728
    %v885 = vpack.c.b16 %v737, %v733
    %v886 = vpack.c.b16 %v738, %v734
    %v887 = vpack.c.b16 %v739, %v735
    %v888 = vpack.c.b16 %v740, %v736
    %v889 = vpack.c.b16 %v745, %v741
    %v890 = vpack.c.b16 %v746, %v742
    %v891 = vpack.c.b16 %v747, %v743
    %v892 = vpack.c.b16 %v748, %v744
    %v893 = vpack.c.b16 %v753, %v749
    %v894 = vpack.c.b16 %v754, %v750
    %v895 = vpack.c.b16 %v755, %v751
    %v896 = vpack.c.b16 %v756, %v752
    %v897 = vpack.c.b16 %v761, %v757
    %v898 = vpack.c.b16 %v762, %v758
    %v899 = vpack.c.b16 %v763, %v759
    %v900 = vpack.c.b16 %v764, %v760
    %v901 = vpack.c.b16 %v769, %v765
    %v902 = vpack.c.b16 %v770, %v766
    %v903 = vpack.c.b16 %v771, %v767
    %v904 = vpack.c.b16 %v772, %v768
    %v905 = vpack.c.b16 %v777, %v773
    %v906 = vpack.c.b16 %v778, %v774
    %v907 = vpack.c.b16 %v779, %v775
    %v908 = vpack.c.b16 %v780, %v776
    %1037 = vmatprep.subr.bf16.mxu0 %v810
    %1038 = vmatpush1.bf16.msra.mxu0 %v809
    %1039 = vmatprep.subr.bf16.mxu0 %v806
    %1040 = vmatpush1.bf16.msra.mxu0 %v805
    %1041 = vmatprep.subr.bf16.mxu0 %v802
    %1042 = vmatpush1.bf16.msra.mxu0 %v801
    %1043 = vmatprep.subr.bf16.mxu0 %v798
    %1044 = vmatpush1.bf16.msra.mxu0 %v797
    %1045 = vmatprep.subr.bf16.mxu0 %v794
    %1046 = vmatpush1.bf16.msra.mxu0 %v793
    %1047 = vmatprep.subr.bf16.mxu0 %v790
    %1048 = vmatpush1.bf16.msra.mxu0 %v789
    %1049 = vmatprep.subr.bf16.mxu0 %v786
    %1050 = vmatpush1.bf16.msra.mxu0 %v785
    %1051 = vmatprep.subr.bf16.mxu0 %v782
    %1052 = vmatpush1.bf16.msra.mxu0 %v781
    %1053 = vmatprep.subr.bf16.mxu0 %v842
    %1054 = vmatpush2.bf16.msra.mxu0 %v841
    %1055 = vmatprep.subr.bf16.mxu0 %v838
    %1056 = vmatpush2.bf16.msra.mxu0 %v837
    %1057 = vmatprep.subr.bf16.mxu0 %v834
    %1058 = vmatpush2.bf16.msra.mxu0 %v833
    %1059 = vmatprep.subr.bf16.mxu0 %v830
    %1060 = vmatpush2.bf16.msra.mxu0 %v829
    %1061 = vmatprep.subr.bf16.mxu0 %v826
    %1062 = vmatpush2.bf16.msra.mxu0 %v825
    %1063 = vmatprep.subr.bf16.mxu0 %v822
    %1064 = vmatpush2.bf16.msra.mxu0 %v821
    %1065 = vmatprep.subr.bf16.mxu0 %v818
    %1066 = vmatpush2.bf16.msra.mxu0 %v817
    %1067 = vmatprep.subr.bf16.mxu0 %v814
    %1068 = vmatpush2.bf16.msra.mxu0 %v813
    %1069 = vmatprep.mubr.bf16.mxu0 %v244
    %1070 = vmatmul.mubr.bf16.gmra.mxu0 %v243
    %v1071 = vpop.f32.mrf.mxu0
    %v1072 = vadd.f32 %v380, %v1071
    %v1073 = vpop.f32.mrf.mxu0
    %v1074 = vadd.f32 %v384, %v1073
    %v1075 = vpop.f32.mrf.mxu0
    %v1076 = vadd.f32 %v380, %v1075
    %v1077 = vpop.f32.mrf.mxu0
    %v1078 = vadd.f32 %v384, %v1077
    %1079 = vdwg.mxu0
    %1080 = vmatprep.subr.bf16.mxu0 %v874
    %1081 = vmatpush1.bf16.msra.mxu0 %v873
    %1082 = vmatprep.subr.bf16.mxu0 %v870
    %1083 = vmatpush1.bf16.msra.mxu0 %v869
    %1084 = vmatprep.subr.bf16.mxu0 %v866
    %1085 = vmatpush1.bf16.msra.mxu0 %v865
    %1086 = vmatprep.subr.bf16.mxu0 %v862
    %1087 = vmatpush1.bf16.msra.mxu0 %v861
    %1088 = vmatprep.subr.bf16.mxu0 %v858
    %1089 = vmatpush1.bf16.msra.mxu0 %v857
    %1090 = vmatprep.subr.bf16.mxu0 %v854
    %1091 = vmatpush1.bf16.msra.mxu0 %v853
    %1092 = vmatprep.subr.bf16.mxu0 %v850
    %1093 = vmatpush1.bf16.msra.mxu0 %v849
    %1094 = vmatprep.subr.bf16.mxu0 %v846
    %1095 = vmatpush1.bf16.msra.mxu0 %v845
    %1096 = vmatprep.subr.bf16.mxu0 %v906
    %1097 = vmatpush2.bf16.msra.mxu0 %v905
    %1098 = vmatprep.subr.bf16.mxu0 %v902
    %1099 = vmatpush2.bf16.msra.mxu0 %v901
    %1100 = vmatprep.subr.bf16.mxu0 %v898
    %1101 = vmatpush2.bf16.msra.mxu0 %v897
    %1102 = vmatprep.subr.bf16.mxu0 %v894
    %1103 = vmatpush2.bf16.msra.mxu0 %v893
    %1104 = vmatprep.subr.bf16.mxu0 %v890
    %1105 = vmatpush2.bf16.msra.mxu0 %v889
    %1106 = vmatprep.subr.bf16.mxu0 %v886
    %1107 = vmatpush2.bf16.msra.mxu0 %v885
    %1108 = vmatprep.subr.bf16.mxu0 %v882
    %1109 = vmatpush2.bf16.msra.mxu0 %v881
    %1110 = vmatprep.subr.bf16.mxu0 %v878
    %1111 = vmatpush2.bf16.msra.mxu0 %v877
    %1112 = vmatprep.mubr.bf16.mxu0 %v246
    %1113 = vmatmul.mubr.bf16.gmra.mxu0 %v245
    %v1114 = vpop.f32.mrf.mxu0
    %v1115 = vadd.f32 %v1072, %v1114
    %v1116 = vpop.f32.mrf.mxu0
    %v1117 = vadd.f32 %v1074, %v1116
    %v1118 = vpop.f32.mrf.mxu0
    %v1119 = vadd.f32 %v1076, %v1118
    %v1120 = vpop.f32.mrf.mxu0
    %v1121 = vadd.f32 %v1078, %v1120
    %1122 = vdwg.mxu0
    %1123 = vmatprep.subr.bf16.mxu0 %v812
    %1124 = vmatpush1.bf16.msra.mxu0 %v811
    %1125 = vmatprep.subr.bf16.mxu0 %v808
    %1126 = vmatpush1.bf16.msra.mxu0 %v807
    %1127 = vmatprep.subr.bf16.mxu0 %v804
    %1128 = vmatpush1.bf16.msra.mxu0 %v803
    %1129 = vmatprep.subr.bf16.mxu0 %v800
    %1130 = vmatpush1.bf16.msra.mxu0 %v799
    %1131 = vmatprep.subr.bf16.mxu0 %v796
    %1132 = vmatpush1.bf16.msra.mxu0 %v795
    %1133 = vmatprep.subr.bf16.mxu0 %v792
    %1134 = vmatpush1.bf16.msra.mxu0 %v791
    %1135 = vmatprep.subr.bf16.mxu0 %v788
    %1136 = vmatpush1.bf16.msra.mxu0 %v787
    %1137 = vmatprep.subr.bf16.mxu0 %v784
    %1138 = vmatpush1.bf16.msra.mxu0 %v783
    %1139 = vmatprep.subr.bf16.mxu0 %v844
    %1140 = vmatpush2.bf16.msra.mxu0 %v843
    %1141 = vmatprep.subr.bf16.mxu0 %v840
    %1142 = vmatpush2.bf16.msra.mxu0 %v839
    %1143 = vmatprep.subr.bf16.mxu0 %v836
    %1144 = vmatpush2.bf16.msra.mxu0 %v835
    %1145 = vmatprep.subr.bf16.mxu0 %v832
    %1146 = vmatpush2.bf16.msra.mxu0 %v831
    %1147 = vmatprep.subr.bf16.mxu0 %v828
    %1148 = vmatpush2.bf16.msra.mxu0 %v827
    %1149 = vmatprep.subr.bf16.mxu0 %v824
    %1150 = vmatpush2.bf16.msra.mxu0 %v823
    %1151 = vmatprep.subr.bf16.mxu0 %v820
    %1152 = vmatpush2.bf16.msra.mxu0 %v819
    %1153 = vmatprep.subr.bf16.mxu0 %v816
    %1154 = vmatpush2.bf16.msra.mxu0 %v815
    %1155 = vmatprep.mubr.bf16.mxu0 %v244
    %1156 = vmatmul.mubr.bf16.gmra.mxu0 %v243
    %v1157 = vpop.f32.mrf.mxu0
    %v1158 = vadd.f32 %v388, %v1157
    %v1159 = vpop.f32.mrf.mxu0
    %v1160 = vadd.f32 %v392, %v1159
    %v1161 = vpop.f32.mrf.mxu0
    %v1162 = vadd.f32 %v388, %v1161
    %v1163 = vpop.f32.mrf.mxu0
    %v1164 = vadd.f32 %v392, %v1163
    %1165 = vdwg.mxu0
    %1166 = vmatprep.subr.bf16.mxu0 %v876
    %1167 = vmatpush1.bf16.msra.mxu0 %v875
    %1168 = vmatprep.subr.bf16.mxu0 %v872
    %1169 = vmatpush1.bf16.msra.mxu0 %v871
    %1170 = vmatprep.subr.bf16.mxu0 %v868
    %1171 = vmatpush1.bf16.msra.mxu0 %v867
    %1172 = vmatprep.subr.bf16.mxu0 %v864
    %1173 = vmatpush1.bf16.msra.mxu0 %v863
    %1174 = vmatprep.subr.bf16.mxu0 %v860
    %1175 = vmatpush1.bf16.msra.mxu0 %v859
    %1176 = vmatprep.subr.bf16.mxu0 %v856
    %1177 = vmatpush1.bf16.msra.mxu0 %v855
    %1178 = vmatprep.subr.bf16.mxu0 %v852
    %1179 = vmatpush1.bf16.msra.mxu0 %v851
    %1180 = vmatprep.subr.bf16.mxu0 %v848
    %1181 = vmatpush1.bf16.msra.mxu0 %v847
    %1182 = vmatprep.subr.bf16.mxu0 %v908
    %1183 = vmatpush2.bf16.msra.mxu0 %v907
    %1184 = vmatprep.subr.bf16.mxu0 %v904
    %1185 = vmatpush2.bf16.msra.mxu0 %v903
    %1186 = vmatprep.subr.bf16.mxu0 %v900
    %1187 = vmatpush2.bf16.msra.mxu0 %v899
    %1188 = vmatprep.subr.bf16.mxu0 %v896
    %1189 = vmatpush2.bf16.msra.mxu0 %v895
    %1190 = vmatprep.subr.bf16.mxu0 %v892
    %1191 = vmatpush2.bf16.msra.mxu0 %v891
    %1192 = vmatprep.subr.bf16.mxu0 %v888
    %1193 = vmatpush2.bf16.msra.mxu0 %v887
    %1194 = vmatprep.subr.bf16.mxu0 %v884
    %1195 = vmatpush2.bf16.msra.mxu0 %v883
    %1196 = vmatprep.subr.bf16.mxu0 %v880
    %1197 = vmatpush2.bf16.msra.mxu0 %v879
    %1198 = vmatprep.mubr.bf16.mxu0 %v246
    %1199 = vmatmul.mubr.bf16.gmra.mxu0 %v245
    %v1200 = vpop.f32.mrf.mxu0
    %v1201 = vadd.f32 %v1158, %v1200
    %v1202 = vpop.f32.mrf.mxu0
    %v1203 = vadd.f32 %v1160, %v1202
    %v1204 = vpop.f32.mrf.mxu0
    %v1205 = vadd.f32 %v1162, %v1204
    %v1206 = vpop.f32.mrf.mxu0
    %v1207 = vadd.f32 %v1164, %v1206
    %1208 = vdwg.mxu0
    %v1209 = vmax.f32 %v1115, 0.0
    %v1210 = vmax.f32 %v1117, 0.0
    %v1211 = vmax.f32 %v1201, 0.0
    %v1212 = vmax.f32 %v1203, 0.0
    %v1213 = vmax.f32 %v1119, 0.0
    %v1214 = vmax.f32 %v1121, 0.0
    %v1215 = vmax.f32 %v1205, 0.0
    %v1216 = vmax.f32 %v1207, 0.0
    %v1217 = vpack.c.bf16 %v1213, %v1209
    %v1218 = vpack.c.bf16 %v1214, %v1210
    %v1219 = vpack.c.bf16 %v1215, %v1211
    %v1220 = vpack.c.bf16 %v1216, %v1212
    %v1221 = vld [vmem:[#allocation6] sm:$0xf]
    %v1222 = vld [vmem:[#allocation6 + $0x4] sm:$0xf]
    %v1223 = vld [vmem:[#allocation6 + $0x8] sm:$0xf]
    %v1224 = vld [vmem:[#allocation6 + $0xc] sm:$0xf]
    %v1225 = vld [vmem:[#allocation6 + $0x10] sm:$0xf]
    %v1226 = vld [vmem:[#allocation6 + $0x14] sm:$0xf]
    %v1227 = vld [vmem:[#allocation6 + $0x18] sm:$0xf]
    %v1228 = vld [vmem:[#allocation6 + $0x1c] sm:$0xf]
    %v1229 = vld [vmem:[#allocation6 + $0x20] sm:$0xf]
    %v1230 = vld [vmem:[#allocation6 + $0x24] sm:$0xf]
    %v1231 = vld [vmem:[#allocation6 + $0x28] sm:$0xf]
    %v1232 = vld [vmem:[#allocation6 + $0x2c] sm:$0xf]
    %v1233 = vld [vmem:[#allocation6 + $0x30] sm:$0xf]
    %v1234 = vld [vmem:[#allocation6 + $0x34] sm:$0xf]
    %v1235 = vld [vmem:[#allocation6 + $0x38] sm:$0xf]
    %v1236 = vld [vmem:[#allocation6 + $0x3c] sm:$0xf]
    %v1237 = vld [vmem:[#allocation6 + $0x40] sm:$0xf]
    %v1238 = vld [vmem:[#allocation6 + $0x44] sm:$0xf]
    %v1239 = vld [vmem:[#allocation6 + $0x48] sm:$0xf]
    %v1240 = vld [vmem:[#allocation6 + $0x4c] sm:$0xf]
    %v1241 = vld [vmem:[#allocation6 + $0x50] sm:$0xf]
    %v1242 = vld [vmem:[#allocation6 + $0x54] sm:$0xf]
    %v1243 = vld [vmem:[#allocation6 + $0x58] sm:$0xf]
    %v1244 = vld [vmem:[#allocation6 + $0x5c] sm:$0xf]
    %v1245 = vld [vmem:[#allocation6 + $0x60] sm:$0xf]
    %v1246 = vld [vmem:[#allocation6 + $0x64] sm:$0xf]
    %v1247 = vld [vmem:[#allocation6 + $0x68] sm:$0xf]
    %v1248 = vld [vmem:[#allocation6 + $0x6c] sm:$0xf]
    %v1249 = vld [vmem:[#allocation6 + $0x70] sm:$0xf]
    %v1250 = vld [vmem:[#allocation6 + $0x74] sm:$0xf]
    %v1251 = vld [vmem:[#allocation6 + $0x78] sm:$0xf]
    %v1252 = vld [vmem:[#allocation6 + $0x7c] sm:$0xf]
    %v1253 = vld [vmem:[#allocation6 + $0x80] sm:$0xf]
    %v1254 = vld [vmem:[#allocation6 + $0x84] sm:$0xf]
    %v1255 = vld [vmem:[#allocation6 + $0x88] sm:$0xf]
    %v1256 = vld [vmem:[#allocation6 + $0x8c] sm:$0xf]
    %v1257 = vld [vmem:[#allocation6 + $0x90] sm:$0xf]
    %v1258 = vld [vmem:[#allocation6 + $0x94] sm:$0xf]
    %v1259 = vld [vmem:[#allocation6 + $0x98] sm:$0xf]
    %v1260 = vld [vmem:[#allocation6 + $0x9c] sm:$0xf]
    %v1261 = vld [vmem:[#allocation6 + $0xa0] sm:$0xf]
    %v1262 = vld [vmem:[#allocation6 + $0xa4] sm:$0xf]
    %v1263 = vld [vmem:[#allocation6 + $0xa8] sm:$0xf]
    %v1264 = vld [vmem:[#allocation6 + $0xac] sm:$0xf]
    %v1265 = vld [vmem:[#allocation6 + $0xb0] sm:$0xf]
    %v1266 = vld [vmem:[#allocation6 + $0xb4] sm:$0xf]
    %v1267 = vld [vmem:[#allocation6 + $0xb8] sm:$0xf]
    %v1268 = vld [vmem:[#allocation6 + $0xbc] sm:$0xf]
    %v1269 = vld [vmem:[#allocation6 + $0xc0] sm:$0xf]
    %v1270 = vld [vmem:[#allocation6 + $0xc4] sm:$0xf]
    %v1271 = vld [vmem:[#allocation6 + $0xc8] sm:$0xf]
    %v1272 = vld [vmem:[#allocation6 + $0xcc] sm:$0xf]
    %v1273 = vld [vmem:[#allocation6 + $0xd0] sm:$0xf]
    %v1274 = vld [vmem:[#allocation6 + $0xd4] sm:$0xf]
    %v1275 = vld [vmem:[#allocation6 + $0xd8] sm:$0xf]
    %v1276 = vld [vmem:[#allocation6 + $0xdc] sm:$0xf]
    %v1277 = vld [vmem:[#allocation6 + $0xe0] sm:$0xf]
    %v1278 = vld [vmem:[#allocation6 + $0xe4] sm:$0xf]
    %v1279 = vld [vmem:[#allocation6 + $0xe8] sm:$0xf]
    %v1280 = vld [vmem:[#allocation6 + $0xec] sm:$0xf]
    %v1281 = vld [vmem:[#allocation6 + $0xf0] sm:$0xf]
    %v1282 = vld [vmem:[#allocation6 + $0xf4] sm:$0xf]
    %v1283 = vld [vmem:[#allocation6 + $0xf8] sm:$0xf]
    %v1284 = vld [vmem:[#allocation6 + $0xfc] sm:$0xf]
    %v1285 = vld [vmem:[%s6] sm:$0x1]
    %v1287 = vlaneseq
    %v1288 = vshrl.u32 %v1287, 7
    %v1289 = vsub.s32 0, %v1288
    %v1290 = vrot.slane %v1285, %v1289
    %v1356 = vunpack.c.l.b16 %v1221
    %v1357 = vunpack.c.l.b16 %v1222
    %v1358 = vunpack.c.l.b16 %v1223
    %v1359 = vunpack.c.l.b16 %v1224
    %v1360 = vunpack.c.l.b16 %v1225
    %v1361 = vunpack.c.l.b16 %v1226
    %v1362 = vunpack.c.l.b16 %v1227
    %v1363 = vunpack.c.l.b16 %v1228
    %v1364 = vunpack.c.l.b16 %v1229
    %v1365 = vunpack.c.l.b16 %v1230
    %v1366 = vunpack.c.l.b16 %v1231
    %v1367 = vunpack.c.l.b16 %v1232
    %v1368 = vunpack.c.l.b16 %v1233
    %v1369 = vunpack.c.l.b16 %v1234
    %v1370 = vunpack.c.l.b16 %v1235
    %v1371 = vunpack.c.l.b16 %v1236
    %v1372 = vunpack.c.l.b16 %v1237
    %v1373 = vunpack.c.l.b16 %v1238
    %v1374 = vunpack.c.l.b16 %v1239
    %v1375 = vunpack.c.l.b16 %v1240
    %v1376 = vunpack.c.l.b16 %v1241
    %v1377 = vunpack.c.l.b16 %v1242
    %v1378 = vunpack.c.l.b16 %v1243
    %v1379 = vunpack.c.l.b16 %v1244
    %v1380 = vunpack.c.l.b16 %v1245
    %v1381 = vunpack.c.l.b16 %v1246
    %v1382 = vunpack.c.l.b16 %v1247
    %v1383 = vunpack.c.l.b16 %v1248
    %v1384 = vunpack.c.l.b16 %v1249
    %v1385 = vunpack.c.l.b16 %v1250
    %v1386 = vunpack.c.l.b16 %v1251
    %v1387 = vunpack.c.l.b16 %v1252
    %v1388 = vunpack.c.l.b16 %v1253
    %v1389 = vunpack.c.l.b16 %v1254
    %v1390 = vunpack.c.l.b16 %v1255
    %v1391 = vunpack.c.l.b16 %v1256
    %v1392 = vunpack.c.l.b16 %v1257
    %v1393 = vunpack.c.l.b16 %v1258
    %v1394 = vunpack.c.l.b16 %v1259
    %v1395 = vunpack.c.l.b16 %v1260
    %v1396 = vunpack.c.l.b16 %v1261
    %v1397 = vunpack.c.l.b16 %v1262
    %v1398 = vunpack.c.l.b16 %v1263
    %v1399 = vunpack.c.l.b16 %v1264
    %v1400 = vunpack.c.l.b16 %v1265
    %v1401 = vunpack.c.l.b16 %v1266
    %v1402 = vunpack.c.l.b16 %v1267
    %v1403 = vunpack.c.l.b16 %v1268
    %v1404 = vunpack.c.l.b16 %v1269
    %v1405 = vunpack.c.l.b16 %v1270
    %v1406 = vunpack.c.l.b16 %v1271
    %v1407 = vunpack.c.l.b16 %v1272
    %v1408 = vunpack.c.l.b16 %v1273
    %v1409 = vunpack.c.l.b16 %v1274
    %v1410 = vunpack.c.l.b16 %v1275
    %v1411 = vunpack.c.l.b16 %v1276
    %v1412 = vunpack.c.l.b16 %v1277
    %v1413 = vunpack.c.l.b16 %v1278
    %v1414 = vunpack.c.l.b16 %v1279
    %v1415 = vunpack.c.l.b16 %v1280
    %v1416 = vunpack.c.l.b16 %v1281
    %v1417 = vunpack.c.l.b16 %v1282
    %v1418 = vunpack.c.l.b16 %v1283
    %v1419 = vunpack.c.l.b16 %v1284
    %v1420 = vpack.c.b16 %v1357, %v1356
    %v1421 = vpack.c.b16 %v1359, %v1358
    %v1422 = vpack.c.b16 %v1361, %v1360
    %v1423 = vpack.c.b16 %v1363, %v1362
    %v1424 = vpack.c.b16 %v1365, %v1364
    %v1425 = vpack.c.b16 %v1367, %v1366
    %v1426 = vpack.c.b16 %v1369, %v1368
    %v1427 = vpack.c.b16 %v1371, %v1370
    %v1428 = vpack.c.b16 %v1373, %v1372
    %v1429 = vpack.c.b16 %v1375, %v1374
    %v1430 = vpack.c.b16 %v1377, %v1376
    %v1431 = vpack.c.b16 %v1379, %v1378
    %v1432 = vpack.c.b16 %v1381, %v1380
    %v1433 = vpack.c.b16 %v1383, %v1382
    %v1434 = vpack.c.b16 %v1385, %v1384
    %v1435 = vpack.c.b16 %v1387, %v1386
    %v1436 = vpack.c.b16 %v1389, %v1388
    %v1437 = vpack.c.b16 %v1391, %v1390
    %v1438 = vpack.c.b16 %v1393, %v1392
    %v1439 = vpack.c.b16 %v1395, %v1394
    %v1440 = vpack.c.b16 %v1397, %v1396
    %v1441 = vpack.c.b16 %v1399, %v1398
    %v1442 = vpack.c.b16 %v1401, %v1400
    %v1443 = vpack.c.b16 %v1403, %v1402
    %v1444 = vpack.c.b16 %v1405, %v1404
    %v1445 = vpack.c.b16 %v1407, %v1406
    %v1446 = vpack.c.b16 %v1409, %v1408
    %v1447 = vpack.c.b16 %v1411, %v1410
    %v1448 = vpack.c.b16 %v1413, %v1412
    %v1449 = vpack.c.b16 %v1415, %v1414
    %v1450 = vpack.c.b16 %v1417, %v1416
    %v1451 = vpack.c.b16 %v1419, %v1418
    %1484 = vmatprep.subr.bf16.mxu0 0
    %1485 = vmatpush1.bf16.msra.mxu0 %v1427
    %1486 = vmatprep.subr.bf16.mxu0 0
    %1487 = vmatpush1.bf16.msra.mxu0 %v1426
    %1488 = vmatprep.subr.bf16.mxu0 0
    %1489 = vmatpush1.bf16.msra.mxu0 %v1425
    %1490 = vmatprep.subr.bf16.mxu0 0
    %1491 = vmatpush1.bf16.msra.mxu0 %v1424
    %1492 = vmatprep.subr.bf16.mxu0 0
    %1493 = vmatpush1.bf16.msra.mxu0 %v1423
    %1494 = vmatprep.subr.bf16.mxu0 0
    %1495 = vmatpush1.bf16.msra.mxu0 %v1422
    %1496 = vmatprep.subr.bf16.mxu0 0
    %1497 = vmatpush1.bf16.msra.mxu0 %v1421
    %1498 = vmatprep.subr.bf16.mxu0 0
    %1499 = vmatpush1.bf16.msra.mxu0 %v1420
    %1500 = vmatprep.subr.bf16.mxu0 0
    %1501 = vmatpush2.bf16.msra.mxu0 %v1435
    %1502 = vmatprep.subr.bf16.mxu0 0
    %1503 = vmatpush2.bf16.msra.mxu0 %v1434
    %1504 = vmatprep.subr.bf16.mxu0 0
    %1505 = vmatpush2.bf16.msra.mxu0 %v1433
    %1506 = vmatprep.subr.bf16.mxu0 0
    %1507 = vmatpush2.bf16.msra.mxu0 %v1432
    %1508 = vmatprep.subr.bf16.mxu0 0
    %1509 = vmatpush2.bf16.msra.mxu0 %v1431
    %1510 = vmatprep.subr.bf16.mxu0 0
    %1511 = vmatpush2.bf16.msra.mxu0 %v1430
    %1512 = vmatprep.subr.bf16.mxu0 0
    %1513 = vmatpush2.bf16.msra.mxu0 %v1429
    %1514 = vmatprep.subr.bf16.mxu0 0
    %1515 = vmatpush2.bf16.msra.mxu0 %v1428
    %1516 = vmatprep.mubr.bf16.mxu0 %v1218
    %1517 = vmatmul.mubr.bf16.gmra.mxu0 %v1217
    %v1518 = vpop.f32.mrf.mxu0
    %v1519 = vadd.f32 %v1290, %v1518
    %v1520 = vpop.f32.mrf.mxu0
    %v1521 = vpop.f32.mrf.mxu0
    %v1522 = vadd.f32 %v1290, %v1521
    %v1523 = vpop.f32.mrf.mxu0
    %1524 = vdwg.mxu0
    %1525 = vmatprep.subr.bf16.mxu0 0
    %1526 = vmatpush1.bf16.msra.mxu0 %v1443
    %1527 = vmatprep.subr.bf16.mxu0 0
    %1528 = vmatpush1.bf16.msra.mxu0 %v1442
    %1529 = vmatprep.subr.bf16.mxu0 0
    %1530 = vmatpush1.bf16.msra.mxu0 %v1441
    %1531 = vmatprep.subr.bf16.mxu0 0
    %1532 = vmatpush1.bf16.msra.mxu0 %v1440
    %1533 = vmatprep.subr.bf16.mxu0 0
    %1534 = vmatpush1.bf16.msra.mxu0 %v1439
    %1535 = vmatprep.subr.bf16.mxu0 0
    %1536 = vmatpush1.bf16.msra.mxu0 %v1438
    %1537 = vmatprep.subr.bf16.mxu0 0
    %1538 = vmatpush1.bf16.msra.mxu0 %v1437
    %1539 = vmatprep.subr.bf16.mxu0 0
    %1540 = vmatpush1.bf16.msra.mxu0 %v1436
    %1541 = vmatprep.subr.bf16.mxu0 0
    %1542 = vmatpush2.bf16.msra.mxu0 %v1451
    %1543 = vmatprep.subr.bf16.mxu0 0
    %1544 = vmatpush2.bf16.msra.mxu0 %v1450
    %1545 = vmatprep.subr.bf16.mxu0 0
    %1546 = vmatpush2.bf16.msra.mxu0 %v1449
    %1547 = vmatprep.subr.bf16.mxu0 0
    %1548 = vmatpush2.bf16.msra.mxu0 %v1448
    %1549 = vmatprep.subr.bf16.mxu0 0
    %1550 = vmatpush2.bf16.msra.mxu0 %v1447
    %1551 = vmatprep.subr.bf16.mxu0 0
    %1552 = vmatpush2.bf16.msra.mxu0 %v1446
    %1553 = vmatprep.subr.bf16.mxu0 0
    %1554 = vmatpush2.bf16.msra.mxu0 %v1445
    %1555 = vmatprep.subr.bf16.mxu0 0
    %1556 = vmatpush2.bf16.msra.mxu0 %v1444
    %1557 = vmatprep.mubr.bf16.mxu0 %v1220
    %1558 = vmatmul.mubr.bf16.gmra.mxu0 %v1219
    %v1559 = vpop.f32.mrf.mxu0
    %v1560 = vadd.f32 %v1519, %v1559
    %v1561 = vpop.f32.mrf.mxu0
    %v1562 = vpop.f32.mrf.mxu0
    %v1563 = vadd.f32 %v1522, %v1562
    %v1564 = vpop.f32.mrf.mxu0
    %1565 = vdwg.mxu0
    %vm1566 = vcmask 23552
    %1567 = vst.msk [vmem:[%s7] sm:$0xff] %vm1566, %v1560
    %1568 = vst.msk [vmem:[%s7 + $0x8] sm:$0xff] %vm1566, %v1563
    // Predicated region
    $region42: #{_forward.1} parent=1 // pred_check
      _
    $region43: #{_forward.1} parent=1 // pred_check_branch
      %1570 = sbr.rel (0) target = $region45
    $region44: #{_forward.1} parent=1 // pred_region
      _
    $region45: #{_forward.1} parent=1 // pred_fallthru
      _
    // Predicated region
    $region46: #{_forward.1} parent=1 // pred_check
      _
    $region47: #{_forward.1} parent=1 // pred_check_branch
      %1572 = sbr.rel (0) target = $region49
    $region48: #{_forward.1} parent=1 // pred_region
      _
    $region49: #{_forward.1} parent=1 // pred_fallthru
      _
    %1573 = vsyncpa [#allocation3], 1
    %1574 = vsyncpa [#allocation5], 1

</llo_original>
